<compile_context>
chip_gen: v7x
topology: tpu7x:2x2x1
jax: 0.10.0
libtpu: 0.0.40
codegen_flags: <defaults>
</compile_context>

<pallas_src>
import jax
import jax.numpy as jnp
from jax import lax
from jax.experimental import pallas as pl
from jax.experimental.pallas import tpu as pltpu

P_DROP = 0.1
SCALE = 1.0 / (1.0 - P_DROP)
# Drop if hash-uniform-u32 < round(p * 2^32); keep probability = 1 - p.
DROP_THRESHOLD_U32 = int(round(P_DROP * (1 << 32))) & 0xFFFFFFFF


def dropout_add_kernel(seed_ref, x465_ref, x436_ref, o_ref):
    tm, H = x465_ref.shape

    # Global coordinates, kept at reduced rank so the linear combine is cheap:
    # row part is (tm, 1), col part is (1, H); only the broadcast-add + fmix32
    # avalanche run at full (tm, H) width.
    r = lax.broadcasted_iota(jnp.int32, (tm, 1), 0) + pl.program_id(0) * tm
    c = lax.broadcasted_iota(jnp.int32, (1, H), 1)
    ru = r.astype(jnp.uint32)
    cu = c.astype(jnp.uint32)
    su = seed_ref[0].astype(jnp.uint32)

    row_part = (ru * jnp.uint32(0x9E3779B1)
                + su * jnp.uint32(0xC2B2AE3D)
                + jnp.uint32(0x27220A95))            # (tm, 1)
    col_part = cu * jnp.uint32(0x85EBCA77)           # (1, H)

    # murmur3 fmix32 avalanche (full-width from here on).
    h = row_part + col_part                          # (tm, H)
    h = h ^ (h >> 16)
    h = h * jnp.uint32(0x85EBCA6B)
    h = h ^ (h >> 13)
    h = h * jnp.uint32(0xC2B2AE35)
    h = h ^ (h >> 16)

    # Direct unsigned threshold compare: keep with probability 1 - p.
    keep = h >= jnp.uint32(DROP_THRESHOLD_U32)

    gain = jnp.where(keep, jnp.float32(SCALE), jnp.float32(0.0))
    o_ref[...] = (x436_ref[...] + x465_ref[...] * gain).astype(o_ref.dtype)


def _pick_tm(rows, H, itemsize, target_bytes=4 * 1024 * 1024):
    """Tile rows: ~target_bytes per operand, multiple of 8 sublanes, and
    capped so the grid has at least ~4 blocks (pipelining + dual-TC on v7x)."""
    tm = max(8, (target_bytes // (H * itemsize)) // 8 * 8)
    # Cap so the grid has >= ~4 blocks (never collapse to a single block).
    cap = max(8, (pl.cdiv(rows, 4) // 8) * 8)
    tm = min(tm, cap)
    # A block's sublane dim must be a multiple of 8 OR equal the full extent.
    tm = min(tm, rows)
    return tm


@jax.jit
def dropout_add(x465, x436, seed):
    B, S, H = x465.shape
    rows = B * S
    itemsize = jnp.dtype(x465.dtype).itemsize
    x465_2d = x465.reshape(rows, H)
    x436_2d = x436.reshape(rows, H)

    tm = _pick_tm(rows, H, itemsize)
    grid = (pl.cdiv(rows, tm),)

    # 3 refs x 2 buffers x tile + margin; capped at 48 MiB (v7x has 64 MiB
    # physical VMEM; v5e/v6e have 128 MiB so this is always safe).
    tile_bytes = tm * H * itemsize
    vmem_limit = int(min(48 * 1024 * 1024,
                         max(32 * 1024 * 1024, 6 * tile_bytes + 4 * 1024 * 1024)))

    out = pl.pallas_call(
        dropout_add_kernel,
        out_shape=jax.ShapeDtypeStruct((rows, H), x465.dtype),
        grid_spec=pltpu.PrefetchScalarGridSpec(
            num_scalar_prefetch=1,
            grid=grid,
            in_specs=[
                pl.BlockSpec((tm, H), lambda i, seed_ref: (i, 0)),
                pl.BlockSpec((tm, H), lambda i, seed_ref: (i, 0)),
            ],
            out_specs=pl.BlockSpec((tm, H), lambda i, seed_ref: (i, 0)),
        ),
        # Alias the residual input (arg index 2 = x436_2d) with the output:
        # avoids a separate HBM output allocation / copy-insertion.
        input_output_aliases={2: 0},
        cost_estimate=pl.CostEstimate(
            flops=10 * rows * H,
            transcendentals=0,
            bytes_accessed=3 * rows * H * itemsize,
        ),
        compiler_params=pltpu.CompilerParams(
            # Every block is independent (stateless per-element hash), so the
            # grid can be sharded across both TensorCores on v7x.
            dimension_semantics=("parallel",),
            vmem_limit_bytes=vmem_limit,
        ),
    )(seed, x465_2d, x436_2d)
    return out.reshape(B, S, H)


if __name__ == "__main__":
    # Small shapes consistent with the module's [1, 384, 768] layout.
    B, S, H = 1, 64, 128
    key = jax.random.PRNGKey(0)
    k1, k2 = jax.random.split(key)
    x465 = jax.random.normal(k1, (B, S, H), dtype=jnp.float32)
    x436 = jax.random.normal(k2, (B, S, H), dtype=jnp.float32)
    seed = jnp.array([0], dtype=jnp.int32)

    out = dropout_add(x465, x436, seed)
    jax.block_until_ready(out)

    # Sanity checks: every element is either x436 + x465/(1-p) (kept) or x436
    # (dropped), and the empirical drop fraction is ~p.
    assert out.shape == (B, S, H) and out.dtype == x465.dtype
    expected_kept = x436 + x465 * SCALE
    kept_mask = jnp.abs(out - expected_kept) < 1e-5
    zero_mask = jnp.abs(out - x436) < 1e-6
    assert bool(jnp.all(kept_mask | zero_mask))
    drop_frac = 1.0 - float(jnp.mean(kept_mask.astype(jnp.float32)))
    assert 0.05 < drop_frac < 0.15  # ~p=0.1 over 8192 elements

    print("KERNEL_OK")
</pallas_src>

<mosaic_0001>
module attributes {stable_mosaic.version = 11 : i64} {
  func.func @dropout_add_kernel(%arg0: i32, %arg1: memref<1xi32, #tpu.memory_space<smem>>, %arg2: memref<16x128xf32, #tpu.memory_space<vmem>>, %arg3: memref<16x128xf32, #tpu.memory_space<vmem>>, %arg4: memref<16x128xf32, #tpu.memory_space<vmem>>) attributes {dimension_semantics = [#tpu.dimension_semantics<parallel>], iteration_bounds = array<i64: 4>, scalar_prefetch = 1 : i64, scratch_operands = 0 : i64, tpu.core_type = #tpu.core_type<tc>, window_params = [{transform_indices = @transform_0, window_bounds = array<i64: 16, 128>}, {transform_indices = @transform_1, window_bounds = array<i64: 16, 128>}, {transform_indices = @transform_2, window_bounds = array<i64: 16, 128>}]} {
    %0 = tpu.iota {dimensions = array<i32: 0>} : vector<16x1xi32>
    %c16_i32 = arith.constant 16 : i32
    %1 = arith.muli %arg0, %c16_i32 : i32
    %2 = vector.broadcast %1 : i32 to vector<16x1xi32>
    %3 = arith.addi %0, %2 : vector<16x1xi32>
    %4 = tpu.iota {dimensions = array<i32: 1>} : vector<1x128xi32>
    %c0 = arith.constant 0 : index
    %5 = memref.load %arg1[%c0] : memref<1xi32, #tpu.memory_space<smem>>
    %c-1640531535_i32 = arith.constant -1640531535 : i32
    %6 = vector.broadcast %c-1640531535_i32 : i32 to vector<16x1xi32>
    %7 = arith.muli %3, %6 : vector<16x1xi32>
    %c-1028477379_i32 = arith.constant -1028477379 : i32
    %8 = arith.muli %5, %c-1028477379_i32 : i32
    %9 = vector.broadcast %8 : i32 to vector<16x1xi32>
    %10 = arith.addi %7, %9 : vector<16x1xi32>
    %c656542357_i32 = arith.constant 656542357 : i32
    %11 = vector.broadcast %c656542357_i32 : i32 to vector<16x1xi32>
    %12 = arith.addi %10, %11 : vector<16x1xi32>
    %c-2048144777_i32 = arith.constant -2048144777 : i32
    %13 = vector.broadcast %c-2048144777_i32 : i32 to vector<1x128xi32>
    %14 = arith.muli %4, %13 : vector<1x128xi32>
    %15 = vector.broadcast %12 : vector<16x1xi32> to vector<16x128xi32>
    %16 = vector.broadcast %14 : vector<1x128xi32> to vector<16x128xi32>
    %17 = arith.addi %15, %16 : vector<16x128xi32>
    %c16_i32_0 = arith.constant 16 : i32
    %18 = vector.broadcast %c16_i32_0 : i32 to vector<16x128xi32>
    %19 = arith.shrui %17, %18 : vector<16x128xi32>
    %20 = arith.xori %17, %19 : vector<16x128xi32>
    %c-2048144789_i32 = arith.constant -2048144789 : i32
    %21 = vector.broadcast %c-2048144789_i32 : i32 to vector<16x128xi32>
    %22 = arith.muli %20, %21 : vector<16x128xi32>
    %c13_i32 = arith.constant 13 : i32
    %23 = vector.broadcast %c13_i32 : i32 to vector<16x128xi32>
    %24 = arith.shrui %22, %23 : vector<16x128xi32>
    %25 = arith.xori %22, %24 : vector<16x128xi32>
    %c-1028477387_i32 = arith.constant -1028477387 : i32
    %26 = vector.broadcast %c-1028477387_i32 : i32 to vector<16x128xi32>
    %27 = arith.muli %25, %26 : vector<16x128xi32>
    %c16_i32_1 = arith.constant 16 : i32
    %28 = vector.broadcast %c16_i32_1 : i32 to vector<16x128xi32>
    %29 = arith.shrui %27, %28 : vector<16x128xi32>
    %30 = arith.xori %27, %29 : vector<16x128xi32>
    %c429496730_i32 = arith.constant 429496730 : i32
    %31 = vector.broadcast %c429496730_i32 : i32 to vector<16x128xi32>
    %32 = arith.cmpi uge, %30, %31 : vector<16x128xi32>
    %cst = arith.constant 1.11111116 : f32
    %cst_2 = arith.constant 0.000000e+00 : f32
    %33 = vector.broadcast %cst : f32 to vector<16x128xf32>
    %34 = vector.broadcast %cst_2 : f32 to vector<16x128xf32>
    %35 = arith.select %32, %33, %34 : vector<16x128xi1>, vector<16x128xf32>
    %c0_3 = arith.constant 0 : index
    %c0_4 = arith.constant 0 : index
    %36 = vector.load %arg3[%c0_3, %c0_4] : memref<16x128xf32, #tpu.memory_space<vmem>>, vector<16x128xf32>
    %c0_5 = arith.constant 0 : index
    %c0_6 = arith.constant 0 : index
    %37 = vector.load %arg2[%c0_5, %c0_6] : memref<16x128xf32, #tpu.memory_space<vmem>>, vector<16x128xf32>
    %38 = arith.mulf %37, %35 : vector<16x128xf32>
    %39 = arith.addf %36, %38 : vector<16x128xf32>
    %c0_7 = arith.constant 0 : index
    %c0_8 = arith.constant 0 : index
    %40 = vector.load %arg4[%c0_7, %c0_8] : memref<16x128xf32, #tpu.memory_space<vmem>>, vector<16x128xf32>
    tpu.vector_store %arg4[%c0_7, %c0_8], %39 {strides = array<i32>} : memref<16x128xf32, #tpu.memory_space<vmem>>, vector<16x128xf32>,
    return
  }
  func.func @transform_0(%arg0: i32, %arg1: memref<1xi32, #tpu.memory_space<smem>>) -> (i32, i32) {
    %c0_i32 = arith.constant 0 : i32
    %c0_i32_0 = arith.constant 0 : i32
    return %arg0, %c0_i32 : i32, i32
  }
  func.func @transform_1(%arg0: i32, %arg1: memref<1xi32, #tpu.memory_space<smem>>) -> (i32, i32) {
    %c0_i32 = arith.constant 0 : i32
    %c0_i32_0 = arith.constant 0 : i32
    return %arg0, %c0_i32 : i32, i32
  }
  func.func @transform_2(%arg0: i32, %arg1: memref<1xi32, #tpu.memory_space<smem>>) -> (i32, i32) {
    %c0_i32 = arith.constant 0 : i32
    %c0_i32_0 = arith.constant 0 : i32
    return %arg0, %c0_i32 : i32, i32
  }
}

</mosaic_0001>

<llo_original>
// kernel: dropout_add.1
$region0: #{dropout_add.1}
  #allocation0 [shape = 'u32[]', space=smem, size = 0x4, offset = 0x4, fixed_abs, tag = 'smem constant byte address 0x4 - core index']
  #allocation1 [shape = 'u32[144,128]{1,0:T(1,128)}', space=vmem, size = 0x12000, scoped, tag = 'internal scratch']
  #allocation2 [shape = 's32[1]{0}', space=sflag, size = 0x4, scoped, tag = 'scoped memory for dropout_add.1']
  #allocation3 [shape = 's32[1]{0:T(128)S(6)}', space=smem, size = 0x200, scoped, tag = 'prefetched SMEM operand 0']
  %s0 = inlined_call_operand.<no memory space> [shape: s32[1], index: 0, kind: input, shape index: {}]
  %s1 = inlined_call_operand.vmem [shape: f32[64,128], index: 1, kind: input, shape index: {}]
  %s2 = inlined_call_operand.vmem [shape: f32[64,128], index: 2, kind: input, shape index: {}, may-alias: {2,3}]
  %s3 = inlined_call_operand.vmem [shape: f32[64,128], index: 3, kind: output, shape index: {}, may-alias: {2,3}]
  %s4 = sld [smem:[#allocation0]]
  $region41: #{dropout_add.1} parent=0
    _
  %s6 = ssub.s32 1, %s4
  %s7 = scalar_select 0, %s6, %s4
  %8 = sst [smem:[#allocation3]] %s0
  loop: start=0, step=1, limit=6
  $region2: #{dropout_add.1} parent=0 // loop_pre_header
    _
  $region3: #{dropout_add.1} parent=0 // loop_header
    %s10 = sphi 0, %s14
    %p11 = scmp.ge.s32.totalorder %s10, 6
    %s20 = sphi 0, %s22
    %s23 = sphi 0, %s20
    %s24 = sphi 0, %s23
    %s40 = sphi 0, %s24
    %s46 = sphi 0, %s48
    %s49 = sphi 0, %s46
    %s50 = sphi 0, %s49
    %s66 = sphi 0, %s50
    %s72 = sphi 0, %s74
    %s75 = sphi 0, %s72
    %s76 = sphi 0, %s75
    %s92 = sphi 0, %s76
  $region4: #{dropout_add.1} parent=0 // loop_header_branch
    %13 = sbr.rel (%p11) target = $region8
  $region5: #{dropout_add.1} parent=0 // loop_body
    %s15 = ssub.s32 %s10, 1
    %s16 = ssub.s32 %s10, 2
    %s17 = sadd.s32 %s10, 1
    %s18 = ssub.s32 %s10, %s17
    %p19 = scmp.eq.s32.totalorder %s18, 0
    %s21 = sadd.s32 %s20, 1
    %s22 = scalar_select %p19, %s20, %s21
    %p25 = pneg %p19
    %p26 = scmp.eq.s32.totalorder %s10, 3
    %p27 = por %p25, %p26
    %p28 = scmp.ne.s32.totalorder %s20, %s23
    %p29 = scmp.eq.s32.totalorder %s10, 0
    %p30 = por %p28, %p29
    %p31 = scmp.ne.s32.totalorder %s20, %s23
    %p32 = scmp.eq.s32.totalorder %s15, 3
    %p33 = por %p31, %p32
    %p34 = scmp.ne.s32.totalorder %s23, %s24
    %p35 = scmp.eq.s32.totalorder %s15, 0
    %p36 = por %p34, %p35
    %p37 = scmp.ne.s32.totalorder %s23, %s24
    %p38 = scmp.eq.s32.totalorder %s16, 3
    %p39 = por %p37, %p38
    %p41 = scmp.ne.s32.totalorder %s24, %s40
    %p42 = scmp.eq.s32.totalorder %s16, 0
    %p43 = por %p41, %p42
    %s44 = ssub.s32 %s10, %s17
    %p45 = scmp.eq.s32.totalorder %s44, 0
    %s47 = sadd.s32 %s46, 1
    %s48 = scalar_select %p45, %s46, %s47
    %p51 = pneg %p45
    %p52 = scmp.eq.s32.totalorder %s10, 3
    %p53 = por %p51, %p52
    %p54 = scmp.ne.s32.totalorder %s46, %s49
    %p55 = scmp.eq.s32.totalorder %s10, 0
    %p56 = por %p54, %p55
    %p57 = scmp.ne.s32.totalorder %s46, %s49
    %p58 = scmp.eq.s32.totalorder %s15, 3
    %p59 = por %p57, %p58
    %p60 = scmp.ne.s32.totalorder %s49, %s50
    %p61 = scmp.eq.s32.totalorder %s15, 0
    %p62 = por %p60, %p61
    %p63 = scmp.ne.s32.totalorder %s49, %s50
    %p64 = scmp.eq.s32.totalorder %s16, 3
    %p65 = por %p63, %p64
    %p67 = scmp.ne.s32.totalorder %s50, %s66
    %p68 = scmp.eq.s32.totalorder %s16, 0
    %p69 = por %p67, %p68
    %s70 = ssub.s32 %s10, %s17
    %p71 = scmp.eq.s32.totalorder %s70, 0
    %s73 = sadd.s32 %s72, 1
    %s74 = scalar_select %p71, %s72, %s73
    %p77 = pneg %p71
    %p78 = scmp.eq.s32.totalorder %s10, 3
    %p79 = por %p77, %p78
    %p80 = scmp.ne.s32.totalorder %s72, %s75
    %p81 = scmp.eq.s32.totalorder %s10, 0
    %p82 = por %p80, %p81
    %p83 = scmp.ne.s32.totalorder %s72, %s75
    %p84 = scmp.eq.s32.totalorder %s15, 3
    %p85 = por %p83, %p84
    %p86 = scmp.ne.s32.totalorder %s75, %s76
    %p87 = scmp.eq.s32.totalorder %s15, 0
    %p88 = por %p86, %p87
    %p89 = scmp.ne.s32.totalorder %s75, %s76
    %p90 = scmp.eq.s32.totalorder %s16, 3
    %p91 = por %p89, %p90
    %p93 = scmp.ne.s32.totalorder %s76, %s92
    %p94 = scmp.eq.s32.totalorder %s16, 0
    %p95 = por %p93, %p94
    %p96 = scmp.le.s32.totalorder 1, %s10
    %p97 = scmp.lt.s32.totalorder %s10, 5
    %p98 = pnand %p96, %p97
    %p99 = pneg %p98
    // Predicated region
    $region9: #{dropout_add.1} parent=5 // pred_check
      _
    $region10: #{dropout_add.1} parent=5 // pred_check_branch
      %101 = sbr.rel (%p98) target = $region12
    $region11: #{dropout_add.1} parent=5 // pred_region
      %s102 = ssub.s32 %s10, 1
    $region12: #{dropout_add.1} parent=5 // pred_fallthru
      _
    %p103 = scmp.lt.s32.totalorder %s10, 4
    // Predicated region
    $region13: #{dropout_add.1} parent=5 // pred_check
      %p104 = pneg %p103
    $region14: #{dropout_add.1} parent=5 // pred_check_branch
      %106 = sbr.rel (%p104) target = $region16
    $region15: #{dropout_add.1} parent=5 // pred_region
      // Predicated region
      $region17: #{dropout_add.1} parent=15 // pred_check
        %p107 = pneg %p30
      $region18: #{dropout_add.1} parent=15 // pred_check_branch
        %109 = sbr.rel (%p107) target = $region20
      $region19: #{dropout_add.1} parent=15 // pred_region
        %s110 = smul.u32 2, %s10
        %p111 = scmp.lt.s32.totalorder %s110, 7
        %s112 = scalar_select %p111, %s110, 7
        %s113 = smul.addr %s112, 8
        %s114 = scalar_lea.vmem %s1, %s113
        %s115 = smul.u32 2, %s10
      $region20: #{dropout_add.1} parent=15 // pred_fallthru
        _
      // Predicated region
      $region21: #{dropout_add.1} parent=15 // pred_check
        %p116 = pneg %p56
      $region22: #{dropout_add.1} parent=15 // pred_check_branch
        %118 = sbr.rel (%p116) target = $region24
      $region23: #{dropout_add.1} parent=15 // pred_region
        %s119 = smul.u32 2, %s10
        %p120 = scmp.lt.s32.totalorder %s119, 7
        %s121 = scalar_select %p120, %s119, 7
        %s122 = smul.addr %s121, 8
        %s123 = scalar_lea.vmem %s2, %s122
        %s124 = smul.u32 2, %s10
      $region24: #{dropout_add.1} parent=15 // pred_fallthru
        _
    $region16: #{dropout_add.1} parent=5 // pred_fallthru
      _
    %p125 = scmp.le.s32.totalorder 1, %s10
    %p126 = scmp.lt.s32.totalorder %s10, 5
    %p127 = pnand %p125, %p126
    %p128 = pneg %p127
    // Predicated region
    $region25: #{dropout_add.1} parent=5 // pred_check
      _
    $region26: #{dropout_add.1} parent=5 // pred_check_branch
      %130 = sbr.rel (%p127) target = $region28
    $region27: #{dropout_add.1} parent=5 // pred_region
      %s131 = ssub.s32 %s10, 1
      %s132 = smul.u32 2, %s15
      %p133 = scmp.lt.s32.totalorder %s132, 7
      %s134 = scalar_select %p133, %s132, 7
      %s135 = smul.addr %s134, 8
      %s136 = scalar_lea.vmem %s1, %s135
      %p137 = pneg %p36
      %p138 = pneg %p33
      %s139 = smul.u32 2, %s15
      %p140 = scmp.lt.s32.totalorder %s139, 7
      %s141 = scalar_select %p140, %s139, 7
      %s142 = smul.addr %s141, 8
      %s143 = scalar_lea.vmem %s2, %s142
      %p144 = pneg %p62
      %p145 = pneg %p59
      %p146 = pneg %p88
      %p147 = pneg %p85
      %s148 = smul.u32 2, %s15
      %p149 = scmp.lt.s32.totalorder %s148, 7
      %s150 = scalar_select %p149, %s148, 7
      %s151 = smul.addr %s150, 8
      %s152 = scalar_lea.vmem %s3, %s151
      %s153 = smul.u32 2, %s15
      %p154 = scmp.lt.s32.totalorder %s153, 7
      %s155 = scalar_select %p154, %s153, 7
      %s156 = smul.addr %s155, 8
      %s157 = scalar_lea.vmem %s1, %s156
      %s158 = smul.u32 2, %s15
      %s159 = smul.u32 2, %s15
      %p160 = scmp.lt.s32.totalorder %s159, 7
      %s161 = scalar_select %p160, %s159, 7
      %s162 = smul.addr %s161, 8
      %s163 = scalar_lea.vmem %s2, %s162
      %s164 = smul.u32 2, %s15
      %s165 = smul.u32 2, %s15
      %p166 = scmp.lt.s32.totalorder %s165, 7
      %s167 = scalar_select %p166, %s165, 7
      %s168 = smul.addr %s167, 8
      %s169 = scalar_lea.vmem %s3, %s168
      %s170 = smul.u32 2, %s15
      %v171 = vlaneseq
      %v172 = vshrl.u32 %v171, 7
      %v173 = vadd.s32 %v172, 8
      %s174 = smul.u32 %s15, 16
      %v175 = vstv %s174
      %v176 = vadd.s32 %v172, %v175
      %v177 = vadd.s32 %v173, %v175
      %v178 = vlaneseq
      %v179 = vand.u32 %v178, 127
      %s180 = sld [smem:[#allocation3]]
      %v181 = vmul.u32 %v176, 2654435761
      %v182 = vmul.u32 %v177, 2654435761
      %s183 = smul.u32 %s180, 3266489917
      %v184 = vstv %s183
      %v185 = vadd.s32 %v181, %v184
      %v186 = vadd.s32 %v182, %v184
      %v187 = vadd.s32 %v185, 656542357
      %v188 = vadd.s32 %v186, 656542357
      %v189 = vmul.u32 %v179, 2246822519
      %v190 = vadd.s32 %v187, %v189
      %v191 = vadd.s32 %v188, %v189
      %v192 = vshrl.u32 %v190, 16
      %v193 = vshrl.u32 %v191, 16
      %v194 = vxor.u32 %v190, %v192
      %v195 = vxor.u32 %v191, %v193
      %v196 = vmul.u32 %v194, 2246822507
      %v197 = vmul.u32 %v195, 2246822507
      %v198 = vshrl.u32 %v196, 13
      %v199 = vshrl.u32 %v197, 13
      %v200 = vxor.u32 %v196, %v198
      %v201 = vxor.u32 %v197, %v199
      %v202 = vmul.u32 %v200, 3266489909
      %v203 = vmul.u32 %v201, 3266489909
      %v204 = vshrl.u32 %v202, 16
      %v205 = vshrl.u32 %v203, 16
      %v206 = vxor.u32 %v202, %v204
      %v207 = vxor.u32 %v203, %v205
      %vm208 = vcmp.ge.u32.totalorder %v206, 429496730
      %vm209 = vcmp.ge.u32.totalorder %v207, 429496730
      %v210 = vsel %vm208, 1.1111112, 0.0
      %v211 = vsel %vm209, 1.1111112, 0.0
      %v212 = vld [vmem:[%s163] sm:$0xff]
      %v213 = vld [vmem:[%s163 + $0x8] sm:$0xff]
      %v214 = vld [vmem:[%s157] sm:$0xff]
      %v215 = vld [vmem:[%s157 + $0x8] sm:$0xff]
      %v216 = vmul.f32 %v214, %v210
      %v217 = vmul.f32 %v215, %v211
      %v218 = vadd.f32 %v212, %v216
      %v219 = vadd.f32 %v213, %v217
      %220 = vst [vmem:[%s169] sm:$0xff] %v218
      %221 = vst [vmem:[%s169 + $0x8] sm:$0xff] %v219
      %s222 = smul.u32 2, %s15
      %p223 = scmp.lt.s32.totalorder %s222, 7
      %s224 = scalar_select %p223, %s222, 7
      %s225 = smul.addr %s224, 8
      %s226 = scalar_lea.vmem %s3, %s225
      // Predicated region
      $region29: #{dropout_add.1} parent=27 // pred_check
        %p227 = pneg %p85
      $region30: #{dropout_add.1} parent=27 // pred_check_branch
        %229 = sbr.rel (%p227) target = $region32
      $region31: #{dropout_add.1} parent=27 // pred_region
        %s230 = smul.u32 2, %s15
      $region32: #{dropout_add.1} parent=27 // pred_fallthru
        _
    $region28: #{dropout_add.1} parent=5 // pred_fallthru
      _
    %p231 = scmp.le.s32.totalorder 2, %s10
    // Predicated region
    $region33: #{dropout_add.1} parent=5 // pred_check
      %p232 = pneg %p231
    $region34: #{dropout_add.1} parent=5 // pred_check_branch
      %234 = sbr.rel (%p232) target = $region36
    $region35: #{dropout_add.1} parent=5 // pred_region
      %s235 = ssub.s32 %s10, 2
      // Predicated region
      $region37: #{dropout_add.1} parent=35 // pred_check
        %p236 = pneg %p91
      $region38: #{dropout_add.1} parent=35 // pred_check_branch
        %238 = sbr.rel (%p236) target = $region40
      $region39: #{dropout_add.1} parent=35 // pred_region
        %s239 = smul.u32 2, %s16
        %p240 = scmp.lt.s32.totalorder %s239, 7
        %s241 = scalar_select %p240, %s239, 7
        %s242 = smul.addr %s241, 8
        %s243 = scalar_lea.vmem %s3, %s242
      $region40: #{dropout_add.1} parent=35 // pred_fallthru
        _
    $region36: #{dropout_add.1} parent=5 // pred_fallthru
      _
  $region6: #{dropout_add.1} parent=0 // loop_footer
    %s14 = sadd.s32 1, %s10
  $region7: #{dropout_add.1} parent=0 // loop_footer_branch
    %9 = sbr.rel target = $region3
  $region8: #{dropout_add.1} parent=0 // loop_exit
    _

</llo_original>
